<compile_context>
chip_gen: v6e
topology: v6e:2x2x1
jax: 0.10.0
libtpu: 0.0.40
codegen_flags: <defaults>
</compile_context>

<pallas_src>
import jax
import jax.numpy as jnp
from jax.experimental import pallas as pl
from jax.experimental.pallas import tpu as pltpu


# ---------------------------------------------------------------------------
# phase 1: bases = softmax_N(value_hat . value / sqrt(C)) . value^T + value_hat
# (online softmax over N tiles; queries = value_hat rows (M), keys/values = value)
# ---------------------------------------------------------------------------
def _bases_kernel(x_ref, wq_ref, shift_ref, vhs_ref, vh_ref, bases_ref,
                  m_sc, l_sc, acc_sc):
    n = pl.program_id(1)

    @pl.when(n == 0)
    def _():
        m_sc[...] = jnp.full(m_sc.shape, -jnp.inf, dtype=m_sc.dtype)
        l_sc[...] = jnp.zeros(l_sc.shape, dtype=l_sc.dtype)
        acc_sc[...] = jnp.zeros(acc_sc.shape, dtype=acc_sc.dtype)

    # channel-first value tile for these N columns: ReLU(wq^T . x + shift) -> (C, tn)
    x_t = x_ref[0].astype(jnp.bfloat16)                               # (Cin, tn)
    v_f32 = jnp.maximum(
        jax.lax.dot_general(wq_ref[...], x_t, (((0,), (0,)), ((), ())),
                            preferred_element_type=jnp.float32)
        + shift_ref[...], 0.0)                                        # (C, tn)
    v_b = v_f32.astype(jnp.bfloat16)

    # s[m, j] = <vhat_scaled[m], v[:, j]>   (1/sqrt(C) pre-folded into vhat_scaled)
    s = jnp.dot(vhs_ref[0], v_b, preferred_element_type=jnp.float32)  # (M, tn)

    m_prev = m_sc[...]                                                # (M, 1)
    m_new = jnp.maximum(m_prev, jnp.max(s, axis=-1, keepdims=True))
    alpha = jnp.exp(m_prev - m_new)
    p = jnp.exp(s - m_new)                                            # (M, tn) f32
    l_sc[...] = alpha * l_sc[...] + jnp.sum(p, axis=-1, keepdims=True)
    # acc[m, c] += sum_j p[m, j] * v[c, j]
    acc_sc[...] = alpha * acc_sc[...] + jax.lax.dot_general(
        p.astype(jnp.bfloat16), v_b, (((1,), (1,)), ((), ())),
        preferred_element_type=jnp.float32)
    m_sc[...] = m_new

    @pl.when(n == pl.num_programs(1) - 1)
    def _():
        # exact divide: bases feed all of phase 2 and this runs once per batch
        bases = acc_sc[...] / l_sc[...] + vh_ref[0]                   # (M, C) f32
        bases_ref[0] = bases.astype(bases_ref.dtype)


def _bases_call(x_cf, wq_b, shift_cf, vhat_scaled_b, vhat_f32, tn, vmem_budget):
    B, Cin, N = x_cf.shape
    _, M, C = vhat_f32.shape
    return pl.pallas_call(
        _bases_kernel,
        out_shape=jax.ShapeDtypeStruct((B, M, C), jnp.float32),
        grid=(B, N // tn),
        in_specs=[
            pl.BlockSpec((1, Cin, tn), lambda b, n: (b, 0, n)),
            pl.BlockSpec((Cin, C), lambda b, n: (0, 0)),
            pl.BlockSpec((C, 1), lambda b, n: (0, 0)),
            pl.BlockSpec((1, M, C), lambda b, n: (b, 0, 0)),   # scaled bf16 (scores)
            pl.BlockSpec((1, M, C), lambda b, n: (b, 0, 0)),   # f32 (exact additive term)
        ],
        out_specs=pl.BlockSpec((1, M, C), lambda b, n: (b, 0, 0)),
        scratch_shapes=[
            pltpu.VMEM((M, 1), jnp.float32),   # running max
            pltpu.VMEM((M, 1), jnp.float32),   # running denominator
            pltpu.VMEM((M, C), jnp.float32),   # running numerator
        ],
        compiler_params=pltpu.CompilerParams(
            dimension_semantics=("parallel", "arbitrary"),
            vmem_limit_bytes=vmem_budget),
    )(x_cf, wq_b, shift_cf, vhat_scaled_b, vhat_f32)


# ---------------------------------------------------------------------------
# phase 2 (per N tile, fully parallel), channel-first so N is the lane axis:
#   q = ReLU(wq^T x + shift)                        (C, tn)
#   p = softmax_M(bases_scaled . q)                 (M, tn)
#   out = ReLU(bw^T p + wc^T x + bias)              (Cout, tn)
# where bw = bases @ (W_w^T @ wc), bias = W_b @ wc + cb  (tail re-association).
# ---------------------------------------------------------------------------
def _output_kernel(x_ref, wq_ref, shift_ref, bases_s_ref, bw_ref, wc_ref, bias_ref,
                   out_ref):
    x_t = x_ref[0].astype(jnp.bfloat16)                               # (Cin, tn)
    q_f32 = jnp.maximum(
        jax.lax.dot_general(wq_ref[...], x_t, (((0,), (0,)), ((), ())),
                            preferred_element_type=jnp.float32)
        + shift_ref[...], 0.0)                                        # (C, tn)
    q_b = q_f32.astype(jnp.bfloat16)

    # s[m, j] = <bases_scaled[m], q[:, j]>  (1/sqrt(C) pre-folded into bases_scaled)
    s = jnp.dot(bases_s_ref[0], q_b, preferred_element_type=jnp.float32)   # (M, tn)
    s_max = jnp.max(s, axis=0, keepdims=True)                         # (1, tn)
    p = jnp.exp(s - s_max)                                            # (M, tn)
    denom = jnp.sum(p, axis=0, keepdims=True)
    p = p * pl.reciprocal(denom, approx=True)                         # per-pixel softmax

    # attn[co, j] = sum_m bw[m, co] * p[m, j]
    attn = jax.lax.dot_general(bw_ref[0], p.astype(jnp.bfloat16),
                               (((0,), (0,)), ((), ())),
                               preferred_element_type=jnp.float32)    # (Cout, tn)
    # resid[co, j] = sum_ci wc[ci, co] * x[ci, j]
    resid = jax.lax.dot_general(wc_ref[...], x_t,
                                (((0,), (0,)), ((), ())),
                                preferred_element_type=jnp.float32)   # (Cout, tn)
    out = jnp.maximum(attn + resid + bias_ref[...], 0.0)              # (Cout, tn)
    out_ref[0] = out.astype(out_ref.dtype)


def _output_call(x_cf, wq_b, shift_cf, bases_scaled_b, bw_b, wc_b, bias,
                 tn, out_dtype, vmem_budget):
    B, Cin, N = x_cf.shape
    _, M, C = bases_scaled_b.shape
    Cout = bw_b.shape[-1]
    return pl.pallas_call(
        _output_kernel,
        out_shape=jax.ShapeDtypeStruct((B, Cout, N), out_dtype),
        grid=(B, N // tn),
        in_specs=[
            pl.BlockSpec((1, Cin, tn), lambda b, n: (b, 0, n)),
            pl.BlockSpec((Cin, C), lambda b, n: (0, 0)),
            pl.BlockSpec((C, 1), lambda b, n: (0, 0)),
            pl.BlockSpec((1, M, C), lambda b, n: (b, 0, 0)),
            pl.BlockSpec((1, M, Cout), lambda b, n: (b, 0, 0)),
            pl.BlockSpec((Cin, Cout), lambda b, n: (0, 0)),
            pl.BlockSpec((Cout, 1), lambda b, n: (0, 0)),
        ],
        out_specs=pl.BlockSpec((1, Cout, tn), lambda b, n: (b, 0, n)),
        compiler_params=pltpu.CompilerParams(
            dimension_semantics=("parallel", "parallel"),
            vmem_limit_bytes=vmem_budget),
    )(x_cf, wq_b, shift_cf, bases_scaled_b, bw_b, wc_b, bias)


# ---------------------------------------------------------------------------
# VMEM budgeting (generation-aware, includes in-kernel temporaries)
# ---------------------------------------------------------------------------
def _vmem_budget_bytes():
    """~3/4 of per-core VMEM (v5e/v6e: 128 MiB, v7x: 64 MiB), capped at 96 MiB."""
    cap = 64 * 1024 * 1024          # conservative fallback (v7x per-core VMEM)
    try:
        info = pltpu.get_tpu_info()
        cap = int(getattr(info, "vmem_capacity_bytes", cap)) or cap
    except Exception:
        pass
    return min(cap * 3 // 4, 96 * 1024 * 1024)


def _step_vmem_bytes(tn, Cin, C, M, Cout, x_bytes):
    """Conservative per-grid-step VMEM estimate (union of both phases): the
    double-buffered pipeline blocks PLUS the in-kernel f32/bf16 temporaries."""
    blocks = 2 * (tn * Cin * x_bytes                 # x tile
                  + Cout * tn * 2                    # phase-2 output tile (bf16)
                  + Cin * C * 2 + C * 4              # wq, shift
                  + 2 * M * C * 4                    # vhat f32 / bases-out f32
                  + M * C * 2                        # vhat/bases scaled bf16
                  + M * Cout * 2 + Cin * Cout * 2 + Cout * 4)
    scratch = M * C * 4 + 2 * M * 4
    temps = (C * tn * (4 + 2)                        # value/query f32 + bf16
             + M * tn * (4 + 4 + 2)                  # scores f32, exp f32, exp bf16
             + Cout * tn * (4 + 4))                  # attn, resid f32
    return blocks + scratch + temps


def _pick_block_n(N, Cin, C, M, Cout, x_bytes, budget, block_n=None):
    if block_n is not None:
        assert N % block_n == 0, "block_n must divide H*W"
        return block_n
    # Cap at 1024: HBM roofline ~saturates at 512-1024 and larger tiles eat the
    # pipelining headroom on v7x's smaller VMEM.
    for cand in (1024, 512, 256, 128):
        if N % cand == 0 and _step_vmem_bytes(cand, Cin, C, M, Cout, x_bytes) <= budget:
            return cand
    return N


# ---------------------------------------------------------------------------
# wrapper: NCHW in -> NCHW out; plain-JAX glue only for f_value_2 / weight folding
# ---------------------------------------------------------------------------
def em_nonlocal_forward(params, x_nchw, eps=1e-5, block_n=None, out_dtype=jnp.bfloat16):
    B, Cin, H, W = x_nchw.shape
    C = params["fq_w"].shape[0]        # dim_inter
    Cout = params["conv_w"].shape[0]   # dim_out
    assert Cin == Cout, "residual `context + data_input` requires dim_in == dim_out"
    assert H % 8 == 0 and W % 8 == 0, "f_value_2 uses kernel=stride=8"
    N = H * W
    inv_sqrt_c = float(C) ** -0.5

    # f_query == f_value : 1x1 conv + BN(eval) + ReLU, folded to (wq_s, q_shift)
    wq = params["fq_w"][:, :, 0, 0].T.astype(jnp.float32)               # (Cin, C)
    q_scale = params["fq_bn_gamma"] / jnp.sqrt(params["fq_bn_var"] + eps)
    wq_s = wq * q_scale[None, :]
    q_shift = (params["fq_b"] - params["fq_bn_mean"]) * q_scale + params["fq_bn_beta"]
    wq_b = wq_s.astype(jnp.bfloat16)

    # channel-first view of x: (B, Cin, N) -- free reshape of NCHW, no transpose/cast.
    x_cf = x_nchw.reshape(B, Cin, N)

    # ---- wrapper glue: f_value_2 (8x8 stride-8) + f_value_conv -> vhat (B, M, C) ----
    # TODO(synk): f_value_2's strided conv stays in plain JAX; fusing it into phase 1
    # would require 8-row-aligned spatial tiling.
    value = jnp.maximum(
        jnp.einsum("cd,bcn->bnd", wq_b, x_cf.astype(jnp.bfloat16),
                   preferred_element_type=jnp.float32) + q_shift, 0.0)   # (B, N, C) f32
    value = value.astype(jnp.bfloat16)                                   # halve HBM traffic
    Hp, Wp = H // 8, W // 8
    M = Hp * Wp
    patches = (value.reshape(B, Hp, 8, Wp, 8, C)
               .transpose(0, 1, 3, 2, 4, 5)
               .reshape(B, M, 64 * C))                                   # (kh, kw, ci) order
    w2 = params["fv2_w"].transpose(2, 3, 1, 0).reshape(64 * C, C).astype(jnp.bfloat16)
    vhat = jnp.einsum("bmk,kc->bmc", patches, w2,
                      preferred_element_type=jnp.float32) + params["fv2_b"]
    vhat = vhat @ params["fvc_w"][:, :, 0, 0].T + params["fvc_b"]        # (B, M, C) f32

    # fold W (zero-init 1x1) and final conv + BN(eval); re-associate the tail
    ww = params["W_w"][:, :, 0, 0].T                                     # (C, Cout)
    wb = params["W_b"]                                                   # (Cout,)
    c_scale = params["conv_bn_gamma"] / jnp.sqrt(params["conv_bn_var"] + eps)
    wc = params["conv_w"][:, :, 0, 0].T * c_scale[None, :]               # (Cin, Cout)
    cb = (params["conv_b"] - params["conv_bn_mean"]) * c_scale + params["conv_bn_beta"]
    wwc = ww @ wc                                                        # (C, Cout)
    bias_all = wb @ wc + cb                                              # (Cout,)

    shift_cf = q_shift.reshape(C, 1).astype(jnp.float32)
    vhat_scaled_b = (vhat * inv_sqrt_c).astype(jnp.bfloat16)             # scores operand
    vhat_f32 = vhat.astype(jnp.float32)                                  # exact additive term

    # -------- VMEM budget: generation-aware, includes in-kernel temporaries --------
    x_bytes = jnp.dtype(x_cf.dtype).itemsize
    budget = _vmem_budget_bytes()
    tn = _pick_block_n(N, Cin, C, M, Cout, x_bytes, budget, block_n)
    step_bytes = _step_vmem_bytes(tn, Cin, C, M, Cout, x_bytes)
    assert step_bytes <= budget, (
        f"N tile {tn} needs ~{step_bytes} B of VMEM > budget {budget} B")

    # phase 1: bases (B, M, C) f32
    # TODO(synk): on v7x with B == 1, split the N reduction 2-way (partial m/l/acc
    # outputs merged in the wrapper) so both TensorCores stay busy.
    bases = _bases_call(x_cf, wq_b, shift_cf, vhat_scaled_b, vhat_f32, tn, budget)

    bw = jnp.einsum("bmc,cd->bmd", bases, wwc)                           # (B, M, Cout)

    # phase 2: channel-first output (B, Cout, N) -> NCHW by reshape only
    out = _output_call(x_cf, wq_b, shift_cf,
                       (bases * inv_sqrt_c).astype(jnp.bfloat16),
                       bw.astype(jnp.bfloat16),
                       wc.astype(jnp.bfloat16),
                       bias_all.reshape(Cout, 1).astype(jnp.float32),
                       tn, out_dtype, budget)
    return out.reshape(B, Cout, H, W)


# ---------------------------------------------------------------------------
# params + pure-JAX f32 reference (mirrors the PyTorch module math, eval-mode BN)
# ---------------------------------------------------------------------------
def init_params(key, dim_in, dim_out, dim_inter):
    ks = jax.random.split(key, 8)
    p = {}
    p["fq_w"] = jax.random.normal(ks[0], (dim_inter, dim_in, 1, 1), jnp.float32) * 0.1
    p["fq_b"] = jax.random.normal(ks[1], (dim_inter,), jnp.float32) * 0.1
    p["fq_bn_gamma"] = jnp.ones((dim_inter,), jnp.float32)
    p["fq_bn_beta"] = jnp.zeros((dim_inter,), jnp.float32)
    p["fq_bn_mean"] = jnp.zeros((dim_inter,), jnp.float32)
    p["fq_bn_var"] = jnp.ones((dim_inter,), jnp.float32)
    p["W_w"] = jnp.zeros((dim_out, dim_inter, 1, 1), jnp.float32)   # zero-init per module
    p["W_b"] = jnp.zeros((dim_out,), jnp.float32)
    p["fv2_w"] = jax.random.normal(ks[2], (dim_inter, dim_inter, 8, 8), jnp.float32) * 0.05
    p["fv2_b"] = jax.random.normal(ks[3], (dim_inter,), jnp.float32) * 0.1
    p["fvc_w"] = jax.random.normal(ks[4], (dim_inter, dim_inter, 1, 1), jnp.float32) * 0.1
    p["fvc_b"] = jax.random.normal(ks[5], (dim_inter,), jnp.float32) * 0.1
    p["conv_w"] = jax.random.normal(ks[6], (dim_out, dim_out, 1, 1), jnp.float32) * 0.1
    p["conv_b"] = jax.random.normal(ks[7], (dim_out,), jnp.float32) * 0.1
    p["conv_bn_gamma"] = jnp.ones((dim_out,), jnp.float32)
    p["conv_bn_beta"] = jnp.zeros((dim_out,), jnp.float32)
    p["conv_bn_mean"] = jnp.zeros((dim_out,), jnp.float32)
    p["conv_bn_var"] = jnp.ones((dim_out,), jnp.float32)
    return p


def em_nonlocal_reference(params, x_nchw, eps=1e-5):
    B, Cin, H, W = x_nchw.shape
    x = jnp.transpose(x_nchw, (0, 2, 3, 1)).astype(jnp.float32)
    wq = params["fq_w"][:, :, 0, 0].T
    q_scale = params["fq_bn_gamma"] / jnp.sqrt(params["fq_bn_var"] + eps)
    value = jnp.maximum(((x @ wq + params["fq_b"]) - params["fq_bn_mean"]) * q_scale
                        + params["fq_bn_beta"], 0.0)
    C = value.shape[-1]
    N = H * W
    Hp, Wp = H // 8, W // 8
    M = Hp * Wp
    patches = (value.reshape(B, Hp, 8, Wp, 8, C)
               .transpose(0, 1, 3, 2, 4, 5).reshape(B, M, 64 * C))
    w2 = params["fv2_w"].transpose(2, 3, 1, 0).reshape(64 * C, C)
    vhat = patches @ w2 + params["fv2_b"]
    vhat = vhat @ params["fvc_w"][:, :, 0, 0].T + params["fvc_b"]       # (B,M,C)
    v = value.reshape(B, N, C)
    sb = jax.nn.softmax(jnp.einsum("bmc,bnc->bmn", vhat, v) * C ** -0.5, axis=-1)
    bases = jnp.einsum("bmn,bnc->bmc", sb, v) + vhat
    sm = jax.nn.softmax(jnp.einsum("bnc,bmc->bnm", v, bases) * C ** -0.5, axis=-1)
    ctx = jnp.einsum("bnm,bmc->bnc", sm, bases)
    ctx = ctx @ params["W_w"][:, :, 0, 0].T + params["W_b"]
    z = ctx + x.reshape(B, N, Cin)
    c_scale = params["conv_bn_gamma"] / jnp.sqrt(params["conv_bn_var"] + eps)
    out = jnp.maximum(((z @ params["conv_w"][:, :, 0, 0].T + params["conv_b"])
                       - params["conv_bn_mean"]) * c_scale + params["conv_bn_beta"], 0.0)
    return out.reshape(B, H, W, -1).transpose(0, 3, 1, 2)


if __name__ == "__main__":
    key = jax.random.PRNGKey(0)
    kx, kp, kw = jax.random.split(key, 3)
    dim_in = dim_out = 4      # residual `context + data_input` requires dim_in == dim_out
    dim_inter = 16
    B, H, W = 2, 16, 16       # H, W divisible by 8 (f_value_2 kernel/stride = 8)

    x = jax.random.normal(kx, (B, dim_in, H, W), jnp.float32)
    params = init_params(kp, dim_in, dim_out, dim_inter)

    # module as specified (W is zero-initialized); 2 N-tiles -> exercises online softmax
    out = em_nonlocal_forward(params, x, block_n=128)
    jax.block_until_ready(out)
    assert out.shape == (B, dim_out, H, W)
    assert bool(jnp.all(jnp.isfinite(out)))
    ref = em_nonlocal_reference(params, x)
    out_f = out.astype(jnp.float32)
    assert bool(jnp.allclose(out_f, ref, atol=3e-2, rtol=3e-2)), \
        f"mismatch (zero-W): {float(jnp.max(jnp.abs(out_f - ref)))}"

    # attention branch with non-zero W weights (loaded-checkpoint case)
    params_nz = dict(params)
    params_nz["W_w"] = 0.1 * jax.random.normal(kw, params["W_w"].shape, jnp.float32)
    params_nz["W_b"] = 0.05 * jnp.ones((dim_out,), jnp.float32)
    out2 = em_nonlocal_forward(params_nz, x, block_n=128)
    jax.block_until_ready(out2)
    ref2 = em_nonlocal_reference(params_nz, x)
    assert bool(jnp.all(jnp.isfinite(out2)))
    out2_f = out2.astype(jnp.float32)
    assert bool(jnp.allclose(out2_f, ref2, atol=3e-2, rtol=3e-2)), \
        f"mismatch (nonzero-W): {float(jnp.max(jnp.abs(out2_f - ref2)))}"

    # auto tile selection path (budget-aware _pick_block_n)
    out3 = em_nonlocal_forward(params_nz, x)
    jax.block_until_ready(out3)
    assert bool(jnp.all(jnp.isfinite(out3)))
    assert bool(jnp.allclose(out3.astype(jnp.float32), ref2, atol=3e-2, rtol=3e-2)), \
        "mismatch (auto tile)"

    print("KERNEL_OK")
</pallas_src>

<mosaic_0001>
module attributes {stable_mosaic.version = 11 : i64} {
  func.func @_bases_kernel(%arg0: i32, %arg1: i32, %arg2: memref<1x4x128xf32, #tpu.memory_space<vmem>>, %arg3: memref<4x16xbf16, #tpu.memory_space<vmem>>, %arg4: memref<16x1xf32, #tpu.memory_space<vmem>>, %arg5: memref<1x4x16xbf16, #tpu.memory_space<vmem>>, %arg6: memref<1x4x16xf32, #tpu.memory_space<vmem>>, %arg7: memref<1x4x16xf32, #tpu.memory_space<vmem>>, %arg8: memref<4x1xf32, #tpu.memory_space<vmem>>, %arg9: memref<4x1xf32, #tpu.memory_space<vmem>>, %arg10: memref<4x16xf32, #tpu.memory_space<vmem>>) attributes {dimension_semantics = [#tpu.dimension_semantics<parallel>, #tpu.dimension_semantics<arbitrary>], iteration_bounds = array<i64: 2, 2>, scalar_prefetch = 0 : i64, scratch_operands = 3 : i64, tpu.core_type = #tpu.core_type<tc>, window_params = [{transform_indices = @transform_0, window_bounds = array<i64: 1, 4, 128>}, {pipeline_mode = #tpu.pipeline_mode<synchronous>, transform_indices = @transform_1, window_bounds = array<i64: 4, 16>}, {pipeline_mode = #tpu.pipeline_mode<synchronous>, transform_indices = @transform_2, window_bounds = array<i64: 16, 1>}, {transform_indices = @transform_3, window_bounds = array<i64: 1, 4, 16>}, {transform_indices = @transform_4, window_bounds = array<i64: 1, 4, 16>}, {transform_indices = @transform_5, window_bounds = array<i64: 1, 4, 16>}]} {
    %c0_i32 = arith.constant 0 : i32
    %0 = arith.cmpi eq, %arg1, %c0_i32 : i32
    %1 = arith.extui %0 : i1 to i32
    %c0_i32_0 = arith.constant 0 : i32
    %2 = arith.cmpi ne, %1, %c0_i32_0 : i32
    scf.if %2 {
      %cst_28 = arith.constant 0xFF800000 : f32
      %43 = vector.broadcast %cst_28 : f32 to vector<4x1xf32>
      %c0_29 = arith.constant 0 : index
      %c0_30 = arith.constant 0 : index
      %44 = vector.load %arg8[%c0_29, %c0_30] : memref<4x1xf32, #tpu.memory_space<vmem>>, vector<4x1xf32>
      tpu.vector_store %arg8[%c0_29, %c0_30], %43 {strides = array<i32>} : memref<4x1xf32, #tpu.memory_space<vmem>>, vector<4x1xf32>,
      %cst_31 = arith.constant 0.000000e+00 : f32
      %45 = vector.broadcast %cst_31 : f32 to vector<4x1xf32>
      %c0_32 = arith.constant 0 : index
      %c0_33 = arith.constant 0 : index
      %46 = vector.load %arg9[%c0_32, %c0_33] : memref<4x1xf32, #tpu.memory_space<vmem>>, vector<4x1xf32>
      tpu.vector_store %arg9[%c0_32, %c0_33], %45 {strides = array<i32>} : memref<4x1xf32, #tpu.memory_space<vmem>>, vector<4x1xf32>,
      %cst_34 = arith.constant 0.000000e+00 : f32
      %47 = vector.broadcast %cst_34 : f32 to vector<4x16xf32>
      %c0_35 = arith.constant 0 : index
      %c0_36 = arith.constant 0 : index
      %48 = vector.load %arg10[%c0_35, %c0_36] : memref<4x16xf32, #tpu.memory_space<vmem>>, vector<4x16xf32>
      tpu.vector_store %arg10[%c0_35, %c0_36], %47 {strides = array<i32>} : memref<4x16xf32, #tpu.memory_space<vmem>>, vector<4x16xf32>,
    } else {
    }
    %c0 = arith.constant 0 : index
    %c0_1 = arith.constant 0 : index
    %c0_2 = arith.constant 0 : index
    %3 = vector.load %arg2[%c0, %c0_1, %c0_2] : memref<1x4x128xf32, #tpu.memory_space<vmem>>, vector<1x4x128xf32>
    %4 = vector.shape_cast %3 : vector<1x4x128xf32> to vector<4x128xf32>
    %5 = arith.truncf %4 : vector<4x128xf32> to vector<4x128xbf16>
    %c0_3 = arith.constant 0 : index
    %c0_4 = arith.constant 0 : index
    %6 = vector.load %arg3[%c0_3, %c0_4] : memref<4x16xbf16, #tpu.memory_space<vmem>>, vector<4x16xbf16>
    %cst = arith.constant dense<0.000000e+00> : vector<16x128xf32>
    %7 = tpu.matmul %6, %5, %cst {dimension_numbers = #tpu.dot_dimension_numbers<[0], [0], [1], [1], [0, 1, 1, 1], [], []>} : vector<4x16xbf16>, vector<4x128xbf16>, vector<16x128xf32> -> vector<16x128xf32>
    %c0_5 = arith.constant 0 : index
    %c0_6 = arith.constant 0 : index
    %8 = vector.load %arg4[%c0_5, %c0_6] : memref<16x1xf32, #tpu.memory_space<vmem>>, vector<16x1xf32>
    %9 = vector.broadcast %8 : vector<16x1xf32> to vector<16x128xf32>
    %10 = arith.addf %7, %9 : vector<16x128xf32>
    %cst_7 = arith.constant 0.000000e+00 : f32
    %11 = vector.broadcast %cst_7 : f32 to vector<16x128xf32>
    %12 = arith.maximumf %10, %11 : vector<16x128xf32>
    %13 = arith.truncf %12 : vector<16x128xf32> to vector<16x128xbf16>
    %c0_8 = arith.constant 0 : index
    %c0_9 = arith.constant 0 : index
    %c0_10 = arith.constant 0 : index
    %14 = vector.load %arg5[%c0_8, %c0_9, %c0_10] : memref<1x4x16xbf16, #tpu.memory_space<vmem>>, vector<1x4x16xbf16>
    %15 = vector.shape_cast %14 : vector<1x4x16xbf16> to vector<4x16xbf16>
    %cst_11 = arith.constant dense<0.000000e+00> : vector<4x128xf32>
    %16 = tpu.matmul %15, %13, %cst_11 {dimension_numbers = #tpu.dot_dimension_numbers<[1], [0], [0], [1], [0, 0, 1, 1], [], []>} : vector<4x16xbf16>, vector<16x128xbf16>, vector<4x128xf32> -> vector<4x128xf32>
    %c0_12 = arith.constant 0 : index
    %c0_13 = arith.constant 0 : index
    %17 = vector.load %arg8[%c0_12, %c0_13] : memref<4x1xf32, #tpu.memory_space<vmem>>, vector<4x1xf32>
    %cst_14 = arith.constant dense<0xFF800000> : vector<4xf32>
    %18 = vector.multi_reduction <maximumf>, %16, %cst_14 [1] : vector<4x128xf32> to vector<4xf32>
    %19 = vector.shape_cast %18 : vector<4xf32> to vector<4x1xf32>
    %20 = arith.maximumf %17, %19 : vector<4x1xf32>
    %21 = arith.subf %17, %20 : vector<4x1xf32>
    %22 = math.exp %21 : vector<4x1xf32>
    %23 = vector.broadcast %20 : vector<4x1xf32> to vector<4x128xf32>
    %24 = arith.subf %16, %23 : vector<4x128xf32>
    %25 = math.exp %24 : vector<4x128xf32>
    %c0_15 = arith.constant 0 : index
    %c0_16 = arith.constant 0 : index
    %26 = vector.load %arg9[%c0_15, %c0_16] : memref<4x1xf32, #tpu.memory_space<vmem>>, vector<4x1xf32>
    %27 = arith.mulf %22, %26 : vector<4x1xf32>
    %cst_17 = arith.constant dense<0.000000e+00> : vector<4xf32>
    %28 = vector.multi_reduction <add>, %25, %cst_17 [1] : vector<4x128xf32> to vector<4xf32>
    %29 = vector.shape_cast %28 : vector<4xf32> to vector<4x1xf32>
    %30 = arith.addf %27, %29 : vector<4x1xf32>
    %c0_18 = arith.constant 0 : index
    %c0_19 = arith.constant 0 : index
    %31 = vector.load %arg9[%c0_18, %c0_19] : memref<4x1xf32, #tpu.memory_space<vmem>>, vector<4x1xf32>
    tpu.vector_store %arg9[%c0_18, %c0_19], %30 {strides = array<i32>} : memref<4x1xf32, #tpu.memory_space<vmem>>, vector<4x1xf32>,
    %c0_20 = arith.constant 0 : index
    %c0_21 = arith.constant 0 : index
    %32 = vector.load %arg10[%c0_20, %c0_21] : memref<4x16xf32, #tpu.memory_space<vmem>>, vector<4x16xf32>
    %33 = vector.broadcast %22 : vector<4x1xf32> to vector<4x16xf32>
    %34 = arith.mulf %33, %32 : vector<4x16xf32>
    %35 = arith.truncf %25 : vector<4x128xf32> to vector<4x128xbf16>
    %cst_22 = arith.constant dense<0.000000e+00> : vector<4x16xf32>
    %36 = tpu.matmul %35, %13, %cst_22 {dimension_numbers = #tpu.dot_dimension_numbers<[1], [1], [0], [0], [0, 0, 1, 0], [], []>} : vector<4x128xbf16>, vector<16x128xbf16>, vector<4x16xf32> -> vector<4x16xf32>
    %37 = arith.addf %34, %36 : vector<4x16xf32>
    %c0_23 = arith.constant 0 : index
    %c0_24 = arith.constant 0 : index
    %38 = vector.load %arg10[%c0_23, %c0_24] : memref<4x16xf32, #tpu.memory_space<vmem>>, vector<4x16xf32>
    tpu.vector_store %arg10[%c0_23, %c0_24], %37 {strides = array<i32>} : memref<4x16xf32, #tpu.memory_space<vmem>>, vector<4x16xf32>,
    %c0_25 = arith.constant 0 : index
    %c0_26 = arith.constant 0 : index
    %39 = vector.load %arg8[%c0_25, %c0_26] : memref<4x1xf32, #tpu.memory_space<vmem>>, vector<4x1xf32>
    tpu.vector_store %arg8[%c0_25, %c0_26], %20 {strides = array<i32>} : memref<4x1xf32, #tpu.memory_space<vmem>>, vector<4x1xf32>,
    %c1_i32 = arith.constant 1 : i32
    %40 = arith.cmpi eq, %arg1, %c1_i32 : i32
    %41 = arith.extui %40 : i1 to i32
    %c0_i32_27 = arith.constant 0 : i32
    %42 = arith.cmpi ne, %41, %c0_i32_27 : i32
    scf.if %42 {
      %c0_28 = arith.constant 0 : index
      %c0_29 = arith.constant 0 : index
      %43 = vector.load %arg10[%c0_28, %c0_29] : memref<4x16xf32, #tpu.memory_space<vmem>>, vector<4x16xf32>
      %c0_30 = arith.constant 0 : index
      %c0_31 = arith.constant 0 : index
      %44 = vector.load %arg9[%c0_30, %c0_31] : memref<4x1xf32, #tpu.memory_space<vmem>>, vector<4x1xf32>
      %45 = vector.broadcast %44 : vector<4x1xf32> to vector<4x16xf32>
      %46 = arith.divf %43, %45 : vector<4x16xf32>
      %c0_32 = arith.constant 0 : index
      %c0_33 = arith.constant 0 : index
      %c0_34 = arith.constant 0 : index
      %47 = vector.load %arg6[%c0_32, %c0_33, %c0_34] : memref<1x4x16xf32, #tpu.memory_space<vmem>>, vector<1x4x16xf32>
      %48 = vector.shape_cast %47 : vector<1x4x16xf32> to vector<4x16xf32>
      %49 = arith.addf %46, %48 : vector<4x16xf32>
      %c0_35 = arith.constant 0 : index
      %c0_36 = arith.constant 0 : index
      %c0_37 = arith.constant 0 : index
      %50 = vector.load %arg7[%c0_35, %c0_36, %c0_37] : memref<1x4x16xf32, #tpu.memory_space<vmem>>, vector<1x4x16xf32>
      %51 = vector.shape_cast %50 : vector<1x4x16xf32> to vector<4x16xf32>
      %52 = vector.shape_cast %49 : vector<4x16xf32> to vector<1x4x16xf32>
      tpu.vector_store %arg7[%c0_35, %c0_36, %c0_37], %52 {strides = array<i32>} : memref<1x4x16xf32, #tpu.memory_space<vmem>>, vector<1x4x16xf32>,
    } else {
    }
    return
  }
  func.func @transform_0(%arg0: i32, %arg1: i32) -> (i32, i32, i32) {
    %c0_i32 = arith.constant 0 : i32
    %c0_i32_0 = arith.constant 0 : i32
    return %arg0, %c0_i32, %arg1 : i32, i32, i32
  }
  func.func @transform_1(%arg0: i32, %arg1: i32) -> (i32, i32) {
    %c0_i32 = arith.constant 0 : i32
    %c0_i32_0 = arith.constant 0 : i32
    %c0_i32_1 = arith.constant 0 : i32
    return %c0_i32, %c0_i32_0 : i32, i32
  }
  func.func @transform_2(%arg0: i32, %arg1: i32) -> (i32, i32) {
    %c0_i32 = arith.constant 0 : i32
    %c0_i32_0 = arith.constant 0 : i32
    %c0_i32_1 = arith.constant 0 : i32
    return %c0_i32, %c0_i32_0 : i32, i32
  }
  func.func @transform_3(%arg0: i32, %arg1: i32) -> (i32, i32, i32) {
    %c0_i32 = arith.constant 0 : i32
    %c0_i32_0 = arith.constant 0 : i32
    %c0_i32_1 = arith.constant 0 : i32
    return %arg0, %c0_i32, %c0_i32_0 : i32, i32, i32
  }
  func.func @transform_4(%arg0: i32, %arg1: i32) -> (i32, i32, i32) {
    %c0_i32 = arith.constant 0 : i32
    %c0_i32_0 = arith.constant 0 : i32
    %c0_i32_1 = arith.constant 0 : i32
    return %arg0, %c0_i32, %c0_i32_0 : i32, i32, i32
  }
  func.func @transform_5(%arg0: i32, %arg1: i32) -> (i32, i32, i32) {
    %c0_i32 = arith.constant 0 : i32
    %c0_i32_0 = arith.constant 0 : i32
    %c0_i32_1 = arith.constant 0 : i32
    return %arg0, %c0_i32, %c0_i32_0 : i32, i32, i32
  }
}

</mosaic_0001>

<llo_original>
// kernel: tpu_custom_call.1
$region0: #{tpu_custom_call.1}
  #allocation0 [shape = 'u32[]', space=smem, size = 0x4, offset = 0x4, fixed_abs, tag = 'smem constant byte address 0x4 - core index']
  #allocation1 [shape = 'u32[144,128]{1,0:T(1,128)}', space=vmem, size = 0x12000, scoped, tag = 'internal scratch']
  #allocation2 [shape = 'f32[4,1]{1,0:T(4,128)}', space=vmem, size = 0x800, scoped, tag = 'scratch operand']
  #allocation3 [shape = 'f32[4,1]{1,0:T(4,128)}', space=vmem, size = 0x800, scoped, tag = 'scratch operand']
  #allocation4 [shape = 'f32[4,16]{1,0:T(4,128)}', space=vmem, size = 0x800, scoped, tag = 'scratch operand']
  %s0 = inlined_call_operand.vmem [shape: f32[2,4,256], index: 0, kind: input, shape index: {}]
  %s1 = inlined_call_operand.hbm [shape: bf16[4,16], index: 1, kind: input, shape index: {}]
  %s2 = inlined_call_operand.vmem [shape: f32[16,1], index: 2, kind: input, shape index: {}]
  %s3 = inlined_call_operand.hbm [shape: bf16[2,4,16], index: 3, kind: input, shape index: {}]
  %s4 = inlined_call_operand.vmem [shape: f32[2,4,16], index: 4, kind: input, shape index: {}]
  %s5 = inlined_call_operand.hbm [shape: f32[2,4,16], index: 5, kind: output, shape index: {}]
  %s6 = sld [smem:[#allocation0]]
  $region69: #{tpu_custom_call.1} parent=0
    _
  %s8 = ssub.s32 1, %s6
  %s9 = scalar_select 0, %s8, %s6
  $region1: #{tpu_custom_call.1} parent=0
    #allocation5 [shape = 'u8[1024]{0}', space=vmem, size = 0x400, scoped, tag = 'input window, operand 1, single buffered']
    #allocation6 [shape = 's32[2]{0}', space=sflag, size = 0x8, scoped, tag = 'scoped memory for tpu_custom_call.1']
    #allocation7 [shape = 's32[2]{0}', space=sflag, size = 0x8, scoped, tag = 'scoped memory for tpu_custom_call.1']
    #allocation8 [shape = 'u8[2048]{0}', space=vmem, size = 0x800, scoped, tag = 'input window, operand 3']
    #allocation9 [shape = 's32[2]{0}', space=sflag, size = 0x8, scoped, tag = 'scoped memory for tpu_custom_call.1']
    #allocation10 [shape = 'u8[4096]{0}', space=vmem, size = 0x1000, scoped, tag = 'output window, operand 0']
    %10 = vsyncpa [#allocation6], 0
    %11 = vsyncpa [#allocation9], 0
    %s12 = scalar_lea.sflag [#allocation9], 1
    %13 = vsyncpa %s12, 0
    %14 = vsyncpa [#allocation7], 0
    %s15 = scalar_lea.sflag [#allocation7], 1
    %16 = vsyncpa %s15, 0
    loop: start=0, step=1, limit=6
    $region2: #{tpu_custom_call.1} parent=1 // loop_pre_header
      _
    $region3: #{tpu_custom_call.1} parent=1 // loop_header
      %s18 = sphi 0, %s22
      %p19 = scmp.ge.s32.totalorder %s18, 6
      %s25 = sphi 0, %s37
      %s26 = sphi 0, %s33
      %s27 = sphi 0, %s25
      %s28 = sphi 0, %s26
      %s29 = sphi 0, %s27
      %s30 = sphi 0, %s28
      %s42 = sphi 0, %s44
      %s45 = sphi 0, %s42
      %s46 = sphi 0, %s45
      %s62 = sphi 0, %s46
      %s66 = sphi 0, %s66
      %s68 = sphi 0, %s66
      %s69 = sphi 0, %s68
      %s83 = sphi 0, %s69
      %s87 = sphi 0, %s87
      %s89 = sphi 0, %s87
      %s90 = sphi 0, %s89
      %s104 = sphi 0, %s90
      %s110 = sphi 0, %s112
      %s113 = sphi 0, %s110
      %s114 = sphi 0, %s113
      %s130 = sphi 0, %s114
      %s136 = sphi 0, %s138
      %s139 = sphi 0, %s136
      %s140 = sphi 0, %s139
      %s156 = sphi 0, %s140
      %s162 = sphi 0, %s164
      %s165 = sphi 0, %s162
      %s166 = sphi 0, %s165
      %s182 = sphi 0, %s166
    $region4: #{tpu_custom_call.1} parent=1 // loop_header_branch
      %21 = sbr.rel (%p19) target = $region8
    $region5: #{tpu_custom_call.1} parent=1 // loop_body
      %s23 = ssub.s32 %s18, 1
      %s24 = ssub.s32 %s18, 2
      %s31 = sadd.s32 1, %s26
      %p32 = scmp.ge.s32.totalorder %s31, 2
      %s33 = scalar_select %p32, 0, %s31
      %s34 = sadd.s32 1, %s25
      %s35 = scalar_select %p32, %s34, %s25
      %p36 = scmp.ge.s32.totalorder %s35, 2
      %s37 = scalar_select %p36, 0, %s35
      %s38 = ssub.s32 %s25, %s37
      %s39 = ssub.s32 %s26, %s33
      %s40 = sor.u32 %s38, %s39
      %p41 = scmp.eq.s32.totalorder %s40, 0
      %s43 = sadd.s32 %s42, 1
      %s44 = scalar_select %p41, %s42, %s43
      %p47 = pneg %p41
      %p48 = scmp.eq.s32.totalorder %s18, 3
      %p49 = por %p47, %p48
      %p50 = scmp.ne.s32.totalorder %s42, %s45
      %p51 = scmp.eq.s32.totalorder %s18, 0
      %p52 = por %p50, %p51
      %p53 = scmp.ne.s32.totalorder %s42, %s45
      %p54 = scmp.eq.s32.totalorder %s23, 3
      %p55 = por %p53, %p54
      %p56 = scmp.ne.s32.totalorder %s45, %s46
      %p57 = scmp.eq.s32.totalorder %s23, 0
      %p58 = por %p56, %p57
      %p59 = scmp.ne.s32.totalorder %s45, %s46
      %p60 = scmp.eq.s32.totalorder %s24, 3
      %p61 = por %p59, %p60
      %p63 = scmp.ne.s32.totalorder %s46, %s62
      %p64 = scmp.eq.s32.totalorder %s24, 0
      %p65 = por %p63, %p64
      %s67 = sadd.s32 %s66, 1
      %p70 = scmp.eq.s32.totalorder %s18, 3
      %p71 = scmp.ne.s32.totalorder %s66, %s68
      %p72 = scmp.eq.s32.totalorder %s18, 0
      %p73 = por %p71, %p72
      %p74 = scmp.ne.s32.totalorder %s66, %s68
      %p75 = scmp.eq.s32.totalorder %s23, 3
      %p76 = por %p74, %p75
      %p77 = scmp.ne.s32.totalorder %s68, %s69
      %p78 = scmp.eq.s32.totalorder %s23, 0
      %p79 = por %p77, %p78
      %p80 = scmp.ne.s32.totalorder %s68, %s69
      %p81 = scmp.eq.s32.totalorder %s24, 3
      %p82 = por %p80, %p81
      %p84 = scmp.ne.s32.totalorder %s69, %s83
      %p85 = scmp.eq.s32.totalorder %s24, 0
      %p86 = por %p84, %p85
      %s88 = sadd.s32 %s87, 1
      %p91 = scmp.eq.s32.totalorder %s18, 3
      %p92 = scmp.ne.s32.totalorder %s87, %s89
      %p93 = scmp.eq.s32.totalorder %s18, 0
      %p94 = por %p92, %p93
      %p95 = scmp.ne.s32.totalorder %s87, %s89
      %p96 = scmp.eq.s32.totalorder %s23, 3
      %p97 = por %p95, %p96
      %p98 = scmp.ne.s32.totalorder %s89, %s90
      %p99 = scmp.eq.s32.totalorder %s23, 0
      %p100 = por %p98, %p99
      %p101 = scmp.ne.s32.totalorder %s89, %s90
      %p102 = scmp.eq.s32.totalorder %s24, 3
      %p103 = por %p101, %p102
      %p105 = scmp.ne.s32.totalorder %s90, %s104
      %p106 = scmp.eq.s32.totalorder %s24, 0
      %p107 = por %p105, %p106
      %s108 = ssub.s32 %s25, %s37
      %p109 = scmp.eq.s32.totalorder %s108, 0
      %s111 = sadd.s32 %s110, 1
      %s112 = scalar_select %p109, %s110, %s111
      %p115 = pneg %p109
      %p116 = scmp.eq.s32.totalorder %s18, 3
      %p117 = por %p115, %p116
      %p118 = scmp.ne.s32.totalorder %s110, %s113
      %p119 = scmp.eq.s32.totalorder %s18, 0
      %p120 = por %p118, %p119
      %p121 = scmp.ne.s32.totalorder %s110, %s113
      %p122 = scmp.eq.s32.totalorder %s23, 3
      %p123 = por %p121, %p122
      %p124 = scmp.ne.s32.totalorder %s113, %s114
      %p125 = scmp.eq.s32.totalorder %s23, 0
      %p126 = por %p124, %p125
      %p127 = scmp.ne.s32.totalorder %s113, %s114
      %p128 = scmp.eq.s32.totalorder %s24, 3
      %p129 = por %p127, %p128
      %p131 = scmp.ne.s32.totalorder %s114, %s130
      %p132 = scmp.eq.s32.totalorder %s24, 0
      %p133 = por %p131, %p132
      %s134 = ssub.s32 %s25, %s37
      %p135 = scmp.eq.s32.totalorder %s134, 0
      %s137 = sadd.s32 %s136, 1
      %s138 = scalar_select %p135, %s136, %s137
      %p141 = pneg %p135
      %p142 = scmp.eq.s32.totalorder %s18, 3
      %p143 = por %p141, %p142
      %p144 = scmp.ne.s32.totalorder %s136, %s139
      %p145 = scmp.eq.s32.totalorder %s18, 0
      %p146 = por %p144, %p145
      %p147 = scmp.ne.s32.totalorder %s136, %s139
      %p148 = scmp.eq.s32.totalorder %s23, 3
      %p149 = por %p147, %p148
      %p150 = scmp.ne.s32.totalorder %s139, %s140
      %p151 = scmp.eq.s32.totalorder %s23, 0
      %p152 = por %p150, %p151
      %p153 = scmp.ne.s32.totalorder %s139, %s140
      %p154 = scmp.eq.s32.totalorder %s24, 3
      %p155 = por %p153, %p154
      %p157 = scmp.ne.s32.totalorder %s140, %s156
      %p158 = scmp.eq.s32.totalorder %s24, 0
      %p159 = por %p157, %p158
      %s160 = ssub.s32 %s25, %s37
      %p161 = scmp.eq.s32.totalorder %s160, 0
      %s163 = sadd.s32 %s162, 1
      %s164 = scalar_select %p161, %s162, %s163
      %p167 = pneg %p161
      %p168 = scmp.eq.s32.totalorder %s18, 3
      %p169 = por %p167, %p168
      %p170 = scmp.ne.s32.totalorder %s162, %s165
      %p171 = scmp.eq.s32.totalorder %s18, 0
      %p172 = por %p170, %p171
      %p173 = scmp.ne.s32.totalorder %s162, %s165
      %p174 = scmp.eq.s32.totalorder %s23, 3
      %p175 = por %p173, %p174
      %p176 = scmp.ne.s32.totalorder %s165, %s166
      %p177 = scmp.eq.s32.totalorder %s23, 0
      %p178 = por %p176, %p177
      %p179 = scmp.ne.s32.totalorder %s165, %s166
      %p180 = scmp.eq.s32.totalorder %s24, 3
      %p181 = por %p179, %p180
      %p183 = scmp.ne.s32.totalorder %s166, %s182
      %p184 = scmp.eq.s32.totalorder %s24, 0
      %p185 = por %p183, %p184
      %p186 = scmp.le.s32.totalorder 1, %s18
      %p187 = scmp.lt.s32.totalorder %s18, 5
      %p188 = pnand %p186, %p187
      %p189 = pneg %p188
      // Predicated region
      $region9: #{tpu_custom_call.1} parent=5 // pred_check
        _
      $region10: #{tpu_custom_call.1} parent=5 // pred_check_branch
        %191 = sbr.rel (%p188) target = $region12
      $region11: #{tpu_custom_call.1} parent=5 // pred_region
        %s192 = ssub.s32 %s18, 1
        // Predicated region
        $region13: #{tpu_custom_call.1} parent=11 // pred_check
          %p193 = pneg %p79
        $region14: #{tpu_custom_call.1} parent=11 // pred_check_branch
          %195 = sbr.rel (%p193) target = $region16
        $region15: #{tpu_custom_call.1} parent=11 // pred_region
          %s197 = ssub.s32 32, 32
          %198 = vsyncadd [#allocation6], %s197
          %s200 = sshll.u32 [#allocation5], 4
          %s201 = int_to_ptr.vmem [resolvable:$true] %s200
          %203 = dma.hbm_to_vmem [thread:$0]  %s1, 32, %s201, [#allocation6]
        $region16: #{tpu_custom_call.1} parent=11 // pred_fallthru
          _
        // Predicated region
        $region17: #{tpu_custom_call.1} parent=11 // pred_check
          %p204 = pneg %p100
        $region18: #{tpu_custom_call.1} parent=11 // pred_check_branch
          %206 = sbr.rel (%p204) target = $region20
        $region19: #{tpu_custom_call.1} parent=11 // pred_region
          _
        $region20: #{tpu_custom_call.1} parent=11 // pred_fallthru
          _
      $region12: #{tpu_custom_call.1} parent=5 // pred_fallthru
        _
      %p207 = scmp.lt.s32.totalorder %s18, 4
      // Predicated region
      $region21: #{tpu_custom_call.1} parent=5 // pred_check
        %p208 = pneg %p207
      $region22: #{tpu_custom_call.1} parent=5 // pred_check_branch
        %210 = sbr.rel (%p208) target = $region24
      $region23: #{tpu_custom_call.1} parent=5 // pred_region
        // Predicated region
        $region25: #{tpu_custom_call.1} parent=23 // pred_check
          %p211 = pneg %p52
        $region26: #{tpu_custom_call.1} parent=23 // pred_check_branch
          %213 = sbr.rel (%p211) target = $region28
        $region27: #{tpu_custom_call.1} parent=23 // pred_region
          %p214 = scmp.lt.s32.totalorder %s25, 1
          %s215 = scalar_select %p214, %s25, 1
          %p216 = scmp.lt.s32.totalorder %s26, 1
          %s217 = scalar_select %p216, %s26, 1
          %s218 = smul.addr %s215, 2
          %s219 = sadd.s32 %s217, %s218
          %s220 = smul.addr %s219, 4
          %s221 = scalar_lea.vmem %s0, %s220
        $region28: #{tpu_custom_call.1} parent=23 // pred_fallthru
          _
        // Predicated region
        $region29: #{tpu_custom_call.1} parent=23 // pred_check
          %p222 = pneg %p120
        $region30: #{tpu_custom_call.1} parent=23 // pred_check_branch
          %224 = sbr.rel (%p222) target = $region32
        $region31: #{tpu_custom_call.1} parent=23 // pred_region
          %s225 = sand.u32 %s110, 1
          %s226 = scalar_lea.sflag [#allocation9], %s225
          %s227 = sand.u32 %s110, 1
          %s228 = smul.addr %s227, 2
          %s229 = scalar_lea.vmem [#allocation8], %s228
          %s231 = ssub.s32 32, 32
          %232 = vsyncadd %s226, %s231
          %s233 = smul.addr %s25, 32
          %s234 = scalar_lea.hbm %s3, %s233
          %s236 = sshll.u32 %s229, 4
          %s237 = int_to_ptr.vmem [resolvable:$true] %s236
          %239 = dma.hbm_to_vmem [thread:$0]  %s234, 32, %s237, %s226
        $region32: #{tpu_custom_call.1} parent=23 // pred_fallthru
          _
        // Predicated region
        $region33: #{tpu_custom_call.1} parent=23 // pred_check
          %p240 = pneg %p146
        $region34: #{tpu_custom_call.1} parent=23 // pred_check_branch
          %242 = sbr.rel (%p240) target = $region36
        $region35: #{tpu_custom_call.1} parent=23 // pred_region
          %p243 = scmp.lt.s32.totalorder %s25, 1
          %s244 = scalar_select %p243, %s25, 1
          %s245 = smul.addr %s244, 4
          %s246 = scalar_lea.vmem %s4, %s245
        $region36: #{tpu_custom_call.1} parent=23 // pred_fallthru
          _
      $region24: #{tpu_custom_call.1} parent=5 // pred_fallthru
        _
      %p247 = scmp.le.s32.totalorder 1, %s18
      %p248 = scmp.lt.s32.totalorder %s18, 5
      %p249 = pnand %p247, %p248
      %p250 = pneg %p249
      // Predicated region
      $region37: #{tpu_custom_call.1} parent=5 // pred_check
        _
      $region38: #{tpu_custom_call.1} parent=5 // pred_check_branch
        %252 = sbr.rel (%p249) target = $region40
      $region39: #{tpu_custom_call.1} parent=5 // pred_region
        %s253 = ssub.s32 %s18, 1
        // Predicated region
        $region41: #{tpu_custom_call.1} parent=39 // pred_check
          %p254 = pneg %p79
        $region42: #{tpu_custom_call.1} parent=39 // pred_check_branch
          %256 = sbr.rel (%p254) target = $region44
        $region43: #{tpu_custom_call.1} parent=39 // pred_region
          %257 = dma.done [#allocation6], 32
        $region44: #{tpu_custom_call.1} parent=39 // pred_fallthru
          _
        %s258 = sand.u32 %s113, 1
        %s259 = scalar_lea.sflag [#allocation9], %s258
        %s260 = sand.u32 %s113, 1
        %s261 = smul.addr %s260, 2
        %s262 = scalar_lea.vmem [#allocation8], %s261
        // Predicated region
        $region45: #{tpu_custom_call.1} parent=39 // pred_check
          %p263 = pneg %p126
        $region46: #{tpu_custom_call.1} parent=39 // pred_check_branch
          %265 = sbr.rel (%p263) target = $region48
        $region47: #{tpu_custom_call.1} parent=39 // pred_region
          %266 = dma.done %s259, 32
        $region48: #{tpu_custom_call.1} parent=39 // pred_fallthru
          _
        %p267 = scmp.lt.s32.totalorder %s27, 1
        %s268 = scalar_select %p267, %s27, 1
        %p269 = scmp.lt.s32.totalorder %s28, 1
        %s270 = scalar_select %p269, %s28, 1
        %s271 = smul.addr %s268, 2
        %s272 = sadd.s32 %s270, %s271
        %s273 = smul.addr %s272, 4
        %s274 = scalar_lea.vmem %s0, %s273
        %p275 = pneg %p58
        %p276 = pneg %p55
        %p277 = pneg %p79
        %p278 = pneg %p76
        %p279 = pneg %p100
        %p280 = pneg %p97
        %s281 = sand.u32 %s113, 1
        %s282 = scalar_lea.sflag [#allocation9], %s281
        %s283 = sand.u32 %s113, 1
        %s284 = smul.addr %s283, 2
        %s285 = scalar_lea.vmem [#allocation8], %s284
        %p286 = pneg %p126
        %p287 = pneg %p123
        %p288 = scmp.lt.s32.totalorder %s27, 1
        %s289 = scalar_select %p288, %s27, 1
        %s290 = smul.addr %s289, 4
        %s291 = scalar_lea.vmem %s4, %s290
        %p292 = pneg %p152
        %p293 = pneg %p149
        %p294 = pneg %p178
        %p295 = pneg %p175
        %s296 = sand.u32 %s165, 1
        %s297 = scalar_lea.sflag [#allocation7], %s296
        %s298 = sand.u32 %s165, 1
        %s299 = smul.addr %s298, 4
        %s300 = scalar_lea.vmem [#allocation10], %s299
        %p301 = scmp.lt.s32.totalorder %s27, 1
        %s302 = scalar_select %p301, %s27, 1
        %p303 = scmp.lt.s32.totalorder %s28, 1
        %s304 = scalar_select %p303, %s28, 1
        %s305 = smul.addr %s302, 2
        %s306 = sadd.s32 %s304, %s305
        %s307 = smul.addr %s306, 4
        %s308 = scalar_lea.vmem %s0, %s307
        %p309 = scmp.lt.s32.totalorder %s27, 1
        %s310 = scalar_select %p309, %s27, 1
        %s311 = smul.addr %s310, 4
        %s312 = scalar_lea.vmem %s4, %s311
        %p314 = scmp.eq.s32.totalorder %s28, 0
        // Predicated region
        $region49: #{tpu_custom_call.1} parent=39 // pred_check
          %p315 = pneg %p314
        $region50: #{tpu_custom_call.1} parent=39 // pred_check_branch
          %317 = sbr.rel (%p315) target = $region52
        $region51: #{tpu_custom_call.1} parent=39 // pred_region
          %vm318 = vcmask 3072
          %319 = vst.msk [vmem:[#allocation2] sm:$0xf] %vm318, -inf
          %320 = vst.msk [vmem:[#allocation3] sm:$0xf] %vm318, 0.0
          %vm321 = vcmask 125952
          %322 = vst.msk [vmem:[#allocation4] sm:$0xf] %vm321, 0.0
        $region52: #{tpu_custom_call.1} parent=39 // pred_fallthru
          _
        %v323 = vld [vmem:[%s308] sm:$0xf]
        %v324 = vpack.c.bf16 %v323, %v323
        %v325 = vld [vmem:[#allocation5] sm:$0x3]
        %v326 = vld [vmem:[%s2] sm:$0xff]
        %v327 = vld [vmem:[%s2 + $0x8] sm:$0xff]
        %329 = vset.pattern.permute.xlu0 0
        %330 = vperm.xlu0 %329, %v326
        %v331 = vpop.permute.xlu0 %330
        %334 = vset.pattern.permute.xlu0 0
        %335 = vperm.xlu0 %334, %v327
        %v336 = vpop.permute.xlu0 %335
        %338 = vxpose.xlu0.c.b16.start [1/8] %v325, 128
        %339 = vxpose.xlu0.c.b16.cont [2/8] 0, 128
        %340 = vxpose.xlu0.c.b16.cont [3/8] 0, 128
        %341 = vxpose.xlu0.c.b16.cont [4/8] 0, 128
        %342 = vxpose.xlu0.c.b16.cont [5/8] 0, 128
        %343 = vxpose.xlu0.c.b16.cont [6/8] 0, 128
        %344 = vxpose.xlu0.c.b16.cont [7/8] 0, 128
        %345 = vxpose.xlu0.c.b16.end [8/8] 0, 128
        %v346 = vpop.trf.xlu0
        %v347 = vpop.trf.xlu0
        %v348 = vpop.trf.xlu0
        %v349 = vpop.trf.xlu0
        %v350 = vpop.trf.xlu0
        %v351 = vpop.trf.xlu0
        %v352 = vpop.trf.xlu0
        %v353 = vpop.trf.xlu0
        %vm354 = vcmask 31744
        %v356 = vsel %vm354, %v346, 0
        %vm358 = vcmask 1041408
        %v360 = vsel %vm358, %v324, 0
        %362 = vmatprep.subr.bf16.mxu0 0
        %363 = vmatpush1.bf16.msra.mxu0 0
        %364 = vmatprep.subr.bf16.mxu0 0
        %365 = vmatpush1.bf16.msra.mxu0 0
        %366 = vmatprep.subr.bf16.mxu0 0
        %367 = vmatpush1.bf16.msra.mxu0 0
        %368 = vmatprep.subr.bf16.mxu0 0
        %369 = vmatpush1.bf16.msra.mxu0 0
        %370 = vmatprep.subr.bf16.mxu0 0
        %371 = vmatpush1.bf16.msra.mxu0 0
        %372 = vmatprep.subr.bf16.mxu0 0
        %373 = vmatpush1.bf16.msra.mxu0 0
        %374 = vmatprep.subr.bf16.mxu0 0
        %375 = vmatpush1.bf16.msra.mxu0 0
        %376 = vmatprep.subr.bf16.mxu0 0
        %377 = vmatpush1.bf16.msra.mxu0 %v360
        %378 = vmatprep.subr.bf16.mxu0 0
        %379 = vmatpush2.bf16.msra.mxu0 0
        %380 = vmatprep.subr.bf16.mxu0 0
        %381 = vmatpush2.bf16.msra.mxu0 0
        %382 = vmatprep.subr.bf16.mxu0 0
        %383 = vmatpush2.bf16.msra.mxu0 0
        %384 = vmatprep.subr.bf16.mxu0 0
        %385 = vmatpush2.bf16.msra.mxu0 0
        %386 = vmatprep.subr.bf16.mxu0 0
        %387 = vmatpush2.bf16.msra.mxu0 0
        %388 = vmatprep.subr.bf16.mxu0 0
        %389 = vmatpush2.bf16.msra.mxu0 0
        %390 = vmatprep.subr.bf16.mxu0 0
        %391 = vmatpush2.bf16.msra.mxu0 0
        %392 = vmatprep.subr.bf16.mxu0 0
        %393 = vmatpush2.bf16.msra.mxu0 0
        %394 = vmatprep.mubr.bf16.mxu0 0
        %395 = vmatmul.mubr.bf16.gmra.mxu0 %v356
        %v396 = vpop.f32.mrf.mxu0
        %v397 = vadd.f32 %v331, %v396
        %v398 = vpop.f32.mrf.mxu0
        %v399 = vpop.f32.mrf.mxu0
        %v400 = vadd.f32 %v336, %v399
        %v401 = vpop.f32.mrf.mxu0
        %402 = vdwg.mxu0
        %v403 = vmax.f32 %v397, 0.0
        %v404 = vmax.f32 %v400, 0.0
        %v405 = vpack.c.bf16 %v404, %v403
        %v406 = vld [vmem:[%s262] sm:$0x3]
        %vm407 = vcmask 130048
        %v409 = vsel %vm407, %v406, 0
        %411 = vmatprep.subr.bf16.mxu0 0
        %412 = vmatpush1.bf16.msra.mxu0 0
        %413 = vmatprep.subr.bf16.mxu0 0
        %414 = vmatpush1.bf16.msra.mxu0 0
        %415 = vmatprep.subr.bf16.mxu0 0
        %416 = vmatpush1.bf16.msra.mxu0 0
        %417 = vmatprep.subr.bf16.mxu0 0
        %418 = vmatpush1.bf16.msra.mxu0 0
        %419 = vmatprep.subr.bf16.mxu0 0
        %420 = vmatpush1.bf16.msra.mxu0 0
        %421 = vmatprep.subr.bf16.mxu0 0
        %422 = vmatpush1.bf16.msra.mxu0 0
        %423 = vmatprep.subr.bf16.mxu0 0
        %424 = vmatpush1.bf16.msra.mxu0 0
        %425 = vmatprep.subr.bf16.mxu0 0
        %426 = vmatpush1.bf16.msra.mxu0 %v405
        %427 = vmatprep.subr.bf16.mxu0 0
        %428 = vmatpush2.bf16.msra.mxu0 0
        %429 = vmatprep.subr.bf16.mxu0 0
        %430 = vmatpush2.bf16.msra.mxu0 0
        %431 = vmatprep.subr.bf16.mxu0 0
        %432 = vmatpush2.bf16.msra.mxu0 0
        %433 = vmatprep.subr.bf16.mxu0 0
        %434 = vmatpush2.bf16.msra.mxu0 0
        %435 = vmatprep.subr.bf16.mxu0 0
        %436 = vmatpush2.bf16.msra.mxu0 0
        %437 = vmatprep.subr.bf16.mxu0 0
        %438 = vmatpush2.bf16.msra.mxu0 0
        %439 = vmatprep.subr.bf16.mxu0 0
        %440 = vmatpush2.bf16.msra.mxu0 0
        %441 = vmatprep.subr.bf16.mxu0 0
        %442 = vmatpush2.bf16.msra.mxu0 0
        %443 = vmatprep.mubr.bf16.mxu0 0
        %444 = vmatmul.mubr.bf16.gmra.mxu0 %v409
        %v445 = vpop.f32.mrf.mxu0
        %v446 = vadd.f32 0.0, %v445
        %v447 = vpop.f32.mrf.mxu0
        %v448 = vpop.f32.mrf.mxu0
        %v449 = vpop.f32.mrf.mxu0
        %450 = vdwg.mxu0
        %v451 = vld [vmem:[#allocation2] sm:$0xf]
        %vm452 = vcmask 1043456
        %v453 = vsel %vm452, %v446, -inf
        %454 = vmax.xlane.f32.xlu0 %v453
        %v455 = vpop.xlane.xlu0 %454
        %v456 = vmax.f32 %v451, %v455
        %v457 = vsub.f32 %v451, %v456
        %v458 = vmul.f32 %v457, 1.442695
        %v459 = vpow.pop %v458
        %461 = vset.pattern.permute.xlu0 0
        %462 = vperm.xlu0 %461, %v456
        %v463 = vpop.permute.xlu0 %462
        %v465 = vsub.f32 %v446, %v463
        %v466 = vmul.f32 %v465, 1.442695
        %v467 = vpow.pop %v466
        %v468 = vld [vmem:[#allocation3] sm:$0xf]
        %v469 = vmul.f32 %v459, %v468
        %v470 = vsel %vm452, %v467, 0.0
        %471 = vadd.xlane.f32.xlu0 %v470
        %v472 = vpop.xlane.xlu0 %471
        %v473 = vadd.f32 %v469, %v472
        %vm474 = vcmask 3072
        %475 = vst.msk [vmem:[#allocation3] sm:$0xf] %vm474, %v473
        %v476 = vld [vmem:[#allocation4] sm:$0xf]
        %478 = vset.pattern.permute.xlu0 0
        %479 = vperm.xlu0 %478, %v459
        %v480 = vpop.permute.xlu0 %479
        %v482 = vmul.f32 %v480, %v476
        %v483 = vpack.c.bf16 %v467, %v467
        %484 = vmatprep.subr.bf16.mxu0 0
        %485 = vmatpush1.bf16.xpose.msra.mxu0 0
        %486 = vmatprep.subr.bf16.mxu0 0
        %487 = vmatpush1.bf16.xpose.msra.mxu0 0
        %488 = vmatprep.subr.bf16.mxu0 0
        %489 = vmatpush1.bf16.xpose.msra.mxu0 0
        %490 = vmatprep.subr.bf16.mxu0 0
        %491 = vmatpush1.bf16.xpose.msra.mxu0 0
        %492 = vmatprep.subr.bf16.mxu0 0
        %493 = vmatpush1.bf16.xpose.msra.mxu0 0
        %494 = vmatprep.subr.bf16.mxu0 0
        %495 = vmatpush1.bf16.xpose.msra.mxu0 0
        %496 = vmatprep.subr.bf16.mxu0 0
        %497 = vmatpush1.bf16.xpose.msra.mxu0 0
        %498 = vmatprep.subr.bf16.mxu0 0
        %499 = vmatpush1.bf16.xpose.msra.mxu0 %v405
        %500 = vmatprep.subr.bf16.mxu0 0
        %501 = vmatpush2.bf16.xpose.msra.mxu0 0
        %502 = vmatprep.subr.bf16.mxu0 0
        %503 = vmatpush2.bf16.xpose.msra.mxu0 0
        %504 = vmatprep.subr.bf16.mxu0 0
        %505 = vmatpush2.bf16.xpose.msra.mxu0 0
        %506 = vmatprep.subr.bf16.mxu0 0
        %507 = vmatpush2.bf16.xpose.msra.mxu0 0
        %508 = vmatprep.subr.bf16.mxu0 0
        %509 = vmatpush2.bf16.xpose.msra.mxu0 0
        %510 = vmatprep.subr.bf16.mxu0 0
        %511 = vmatpush2.bf16.xpose.msra.mxu0 0
        %512 = vmatprep.subr.bf16.mxu0 0
        %513 = vmatpush2.bf16.xpose.msra.mxu0 0
        %514 = vmatprep.subr.bf16.mxu0 0
        %515 = vmatpush2.bf16.xpose.msra.mxu0 0
        %516 = vmatprep.mubr.bf16.mxu0 0
        %517 = vmatmul.mubr.bf16.gmra.mxu0 %v483
        %v518 = vpop.f32.mrf.mxu0
        %v519 = vadd.f32 0.0, %v518
        %v520 = vpop.f32.mrf.mxu0
        %v521 = vpop.f32.mrf.mxu0
        %v522 = vpop.f32.mrf.mxu0
        %523 = vdwg.mxu0
        %v524 = vadd.f32 %v482, %v519
        %vm525 = vcmask 125952
        %526 = vst.msk [vmem:[#allocation4] sm:$0xf] %vm525, %v524
        %527 = vst.msk [vmem:[#allocation2] sm:$0xf] %vm474, %v456
        %p528 = scmp.eq.s32.totalorder %s28, 1
        // Predicated region
        $region53: #{tpu_custom_call.1} parent=39 // pred_check
          %p529 = pneg %p528
        $region54: #{tpu_custom_call.1} parent=39 // pred_check_branch
          %531 = sbr.rel (%p529) target = $region56
        $region55: #{tpu_custom_call.1} parent=39 // pred_region
          %v532 = vld [vmem:[#allocation4] sm:$0xf]
          %v533 = vld [vmem:[#allocation3] sm:$0xf]
          %535 = vset.pattern.permute.xlu0 0
          %536 = vperm.xlu0 %535, %v533
          %v537 = vpop.permute.xlu0 %536
          %v539 = vrcp.pop %v537
          %v540 = vmul.f32 %v532, %v539
          %v541 = vld [vmem:[%s312] sm:$0xf]
          %v542 = vadd.f32 %v540, %v541
          %543 = vst.msk [vmem:[%s300] sm:$0xf] %vm525, %v542
        $region56: #{tpu_custom_call.1} parent=39 // pred_fallthru
          _
        %s544 = sand.u32 %s165, 1
        %s545 = scalar_lea.sflag [#allocation7], %s544
        %s546 = sand.u32 %s165, 1
        %s547 = smul.addr %s546, 4
        %s548 = scalar_lea.vmem [#allocation10], %s547
        // Predicated region
        $region57: #{tpu_custom_call.1} parent=39 // pred_check
          %p549 = pneg %p175
        $region58: #{tpu_custom_call.1} parent=39 // pred_check_branch
          %551 = sbr.rel (%p549) target = $region60
        $region59: #{tpu_custom_call.1} parent=39 // pred_region
          %s553 = ssub.s32 64, 64
          %554 = vsyncadd %s545, %s553
          %s555 = smul.addr %s27, 64
          %s556 = scalar_lea.hbm %s5, %s555
          %s558 = sshll.u32 %s548, 4
          %s559 = int_to_ptr.vmem [resolvable:$true] %s558
          %561 = dma.vmem_to_hbm [thread:$0]  %s559, 64, %s556, %s545
        $region60: #{tpu_custom_call.1} parent=39 // pred_fallthru
          _
      $region40: #{tpu_custom_call.1} parent=5 // pred_fallthru
        _
      %p562 = scmp.le.s32.totalorder 2, %s18
      // Predicated region
      $region61: #{tpu_custom_call.1} parent=5 // pred_check
        %p563 = pneg %p562
      $region62: #{tpu_custom_call.1} parent=5 // pred_check_branch
        %565 = sbr.rel (%p563) target = $region64
      $region63: #{tpu_custom_call.1} parent=5 // pred_region
        %s566 = ssub.s32 %s18, 2
        // Predicated region
        $region65: #{tpu_custom_call.1} parent=63 // pred_check
          %p567 = pneg %p181
        $region66: #{tpu_custom_call.1} parent=63 // pred_check_branch
          %569 = sbr.rel (%p567) target = $region68
        $region67: #{tpu_custom_call.1} parent=63 // pred_region
          %s570 = sand.u32 %s166, 1
          %s571 = scalar_lea.sflag [#allocation7], %s570
          %s572 = sand.u32 %s166, 1
          %s573 = smul.addr %s572, 4
          %s574 = scalar_lea.vmem [#allocation10], %s573
          %575 = dma.done %s571, 64
        $region68: #{tpu_custom_call.1} parent=63 // pred_fallthru
          _
      $region64: #{tpu_custom_call.1} parent=5 // pred_fallthru
        _
    $region6: #{tpu_custom_call.1} parent=1 // loop_footer
      %s22 = sadd.s32 1, %s18
    $region7: #{tpu_custom_call.1} parent=1 // loop_footer_branch
      %17 = sbr.rel target = $region3
    $region8: #{tpu_custom_call.1} parent=1 // loop_exit
      _
    %576 = vsyncpa [#allocation6], 1
    %s577 = scalar_lea.sflag [#allocation6], 1
    %578 = vsyncpa %s577, 1
    %579 = vsyncpa [#allocation9], 1
    %s580 = scalar_lea.sflag [#allocation9], 1
    %581 = vsyncpa %s580, 1
    %582 = vsyncpa [#allocation7], 1
    %s583 = scalar_lea.sflag [#allocation7], 1
    %584 = vsyncpa %s583, 1

</llo_original>
